<compile_context>
chip_gen: v5e
topology: v5e:2x2
jax: 0.10.0
libtpu: 0.0.40
codegen_flags: <defaults>
</compile_context>

<pallas_src>
import functools

import jax
import jax.numpy as jnp
from jax.experimental import pallas as pl
from jax.experimental.pallas import tpu as pltpu


def specimen_kernel(patches_ref, pool_ref, wc_ref, bc_ref, w1_ref, b1_ref,
                    sv_ref, w2_ref, b2_ref, out_ref, *,
                    n_points, sv_h, sv_w, tb):
    hw = patches_ref.shape[1]
    k = patches_ref.shape[2]

    # ---- conv backbone: 3x3 "same" conv as one stacked im2col matmul + ReLU ----
    patches = patches_ref[...].reshape(tb * hw, k)                  # [TB*HW, K]
    feat = jnp.maximum(
        jnp.dot(patches, wc_ref[...], preferred_element_type=jnp.float32)
        + bc_ref[...], 0.0)                                         # [TB*HW, Cp]

    # ---- global average pool, folded into the MXU ----
    # pool_ref is block-diagonal [TB, TB*HW] with 1/HW entries.
    pooled = jnp.dot(pool_ref[...], feat,
                     preferred_element_type=jnp.float32)            # [TB, Cp]

    # ---- coordinate head: linear -> sigmoid -> N normalized (x, y) points ----
    coords = jax.nn.sigmoid(
        jnp.dot(pooled, w1_ref[...], preferred_element_type=jnp.float32)
        + b1_ref[...])                                              # [TB, 2N]
    xs = coords[:, :n_points] * (sv_w - 1)                          # [TB, N]
    ys = coords[:, n_points:] * (sv_h - 1)                          # [TB, N]

    # ---- separable differentiable bilinear sampling ----
    row = jax.lax.broadcasted_iota(
        jnp.int32, (tb, n_points, sv_h), 2).astype(jnp.float32)     # [TB,N,Hs]
    col = jax.lax.broadcasted_iota(
        jnp.int32, (tb, n_points, sv_w), 2).astype(jnp.float32)     # [TB,N,Ws]
    wy = jnp.maximum(0.0, 1.0 - jnp.abs(ys[:, :, None] - row))      # [TB,N,Hs]
    wx = jnp.maximum(0.0, 1.0 - jnp.abs(xs[:, :, None] - col))      # [TB,N,Ws]
    sv = sv_ref[...]                                                # [TB,Hs,Ws]
    tmp = jnp.einsum('bnh,bhw->bnw', wy, sv,
                     preferred_element_type=jnp.float32)            # [TB,N,Ws]
    sampled = jnp.sum(tmp * wx, axis=-1)                            # [TB, N]

    # ---- classifier head (weights zero-padded to a lane-dense 128 columns) ----
    out_ref[0] = (jnp.dot(sampled, w2_ref[...],
                          preferred_element_type=jnp.float32)
                  + b2_ref[...])                                    # [TB, OUT_PAD]


def _im2col_3x3_same(x):
    """x: [B, Cin, H, W] -> [B, H*W, Cin*9] (pad=1, stride=1)."""
    # TODO(synk): at production image sizes move the im2col inside the kernel
    # (9 shifted-slice matmuls on a DMA'd padded tile) to avoid 9x HBM traffic.
    B, Cin, H, W = x.shape
    xp = jnp.pad(x, ((0, 0), (0, 0), (1, 1), (1, 1)))
    cols = []
    for di in range(3):
        for dj in range(3):
            cols.append(xp[:, :, di:di + H, dj:dj + W])
    patches = jnp.stack(cols, axis=2)                      # [B, Cin, 9, H, W]
    patches = patches.transpose(0, 3, 4, 1, 2)             # [B, H, W, Cin, 9]
    return patches.reshape(B, H * W, Cin * 9)


def _round_up(x, m):
    return ((x + m - 1) // m) * m


def specimen_classifier_forward(topview, search_view, params, *, n_points,
                                batch_block=8):
    """topview: [B, 3, H, W]; search_view: [B, 1, Hs, Ws]; -> [B, num_classes]."""
    B, Cin, H, W = topview.shape
    _, _, Hs, Ws = search_view.shape
    HW = H * W
    K = Cin * 9

    TB = batch_block if B >= batch_block else B
    n_blocks = -(-B // TB)                   # cdiv
    B_pad = n_blocks * TB

    patches = _im2col_3x3_same(topview.astype(jnp.float32))     # [B, HW, K]
    sv = search_view.astype(jnp.float32).reshape(B, Hs, Ws)     # [B, Hs, Ws]
    if B_pad != B:
        patches = jnp.pad(patches, ((0, B_pad - B), (0, 0), (0, 0)))
        sv = jnp.pad(sv, ((0, B_pad - B), (0, 0), (0, 0)))

    wc, bc = params["wc"], params["bc"]
    w1, b1 = params["w1"], params["b1"]
    w2, b2 = params["w2"], params["b2"]
    conv_ch = wc.shape[1]
    num_classes = w2.shape[1]

    # Block-diagonal pooling matrix (GAP on the MXU).
    pool_mat = (jnp.kron(jnp.eye(TB, dtype=jnp.float32),
                         jnp.ones((1, HW), jnp.float32)) / float(HW))

    # Zero-pad conv channels to a lane-dense width (ReLU(0)=0 and the padded
    # w1 rows are 0, so semantics are unchanged).
    CPAD = _round_up(conv_ch, 128)
    wc_pad = jnp.pad(wc, ((0, 0), (0, CPAD - conv_ch)))
    bc_pad = jnp.pad(bc, ((0, 0), (0, CPAD - conv_ch)))
    w1_pad = jnp.pad(w1, ((0, CPAD - conv_ch), (0, 0)))

    # Zero-pad classifier to a lane-dense output slab.
    OUT_PAD = _round_up(num_classes, 128)
    w2_pad = jnp.pad(w2, ((0, 0), (0, OUT_PAD - num_classes)))
    b2_pad = jnp.pad(b2, ((0, 0), (0, OUT_PAD - num_classes)))

    kern = functools.partial(specimen_kernel, n_points=n_points,
                             sv_h=Hs, sv_w=Ws, tb=TB)
    out = pl.pallas_call(
        kern,
        out_shape=jax.ShapeDtypeStruct((n_blocks, TB, OUT_PAD), jnp.float32),
        grid_spec=pltpu.PrefetchScalarGridSpec(
            num_scalar_prefetch=0,
            grid=(n_blocks,),
            in_specs=[
                pl.BlockSpec((TB, HW, K), lambda g: (g, 0, 0)),
                pl.BlockSpec(pool_mat.shape, lambda g: (0, 0)),
                pl.BlockSpec(wc_pad.shape, lambda g: (0, 0)),
                pl.BlockSpec(bc_pad.shape, lambda g: (0, 0)),
                pl.BlockSpec(w1_pad.shape, lambda g: (0, 0)),
                pl.BlockSpec(b1.shape, lambda g: (0, 0)),
                pl.BlockSpec((TB, Hs, Ws), lambda g: (g, 0, 0)),
                pl.BlockSpec(w2_pad.shape, lambda g: (0, 0)),
                pl.BlockSpec(b2_pad.shape, lambda g: (0, 0)),
            ],
            out_specs=pl.BlockSpec((1, TB, OUT_PAD), lambda g: (g, 0, 0)),
        ),
        compiler_params=pltpu.CompilerParams(
            dimension_semantics=("parallel",)),
    )(patches, pool_mat, wc_pad, bc_pad, w1_pad, b1, sv, w2_pad, b2_pad)

    out = out.reshape(B_pad, OUT_PAD)
    return out[:B, :num_classes]


def reference_forward(topview, search_view, params, *, n_points):
    """Pure-JAX reference with identical semantics (for a correctness check)."""
    B, Cin, H, W = topview.shape
    _, _, Hs, Ws = search_view.shape
    patches = _im2col_3x3_same(topview.astype(jnp.float32))
    feat = jnp.maximum(patches @ params["wc"] + params["bc"], 0.0)
    pooled = feat.mean(axis=1)                                       # [B, C]
    coords = jax.nn.sigmoid(pooled @ params["w1"] + params["b1"])    # [B, 2N]
    xs = coords[:, :n_points] * (Ws - 1)
    ys = coords[:, n_points:] * (Hs - 1)
    row = jnp.arange(Hs, dtype=jnp.float32)
    col = jnp.arange(Ws, dtype=jnp.float32)
    wy = jnp.maximum(0.0, 1.0 - jnp.abs(ys[:, :, None] - row[None, None, :]))
    wx = jnp.maximum(0.0, 1.0 - jnp.abs(xs[:, :, None] - col[None, None, :]))
    sv = search_view.astype(jnp.float32)[:, 0]                       # [B,Hs,Ws]
    sampled = jnp.einsum("bnh,bnw,bhw->bn", wy, wx, sv)              # [B, N]
    return sampled @ params["w2"] + params["b2"]


def init_params(key, *, cin=3, conv_ch=8, n_points=8, num_classes=2):
    ks = jax.random.split(key, 6)
    s = 0.1
    return {
        "wc": s * jax.random.normal(ks[0], (cin * 9, conv_ch), jnp.float32),
        "bc": s * jax.random.normal(ks[1], (1, conv_ch), jnp.float32),
        "w1": s * jax.random.normal(ks[2], (conv_ch, 2 * n_points), jnp.float32),
        "b1": s * jax.random.normal(ks[3], (1, 2 * n_points), jnp.float32),
        "w2": s * jax.random.normal(ks[4], (n_points, num_classes), jnp.float32),
        "b2": s * jax.random.normal(ks[5], (1, num_classes), jnp.float32),
    }


if __name__ == "__main__":
    key = jax.random.PRNGKey(0)
    k_top, k_sv, k_par = jax.random.split(key, 3)

    B, Cin, H, W = 2, 3, 16, 16        # topview image (NCHW)
    Hs, Ws = 32, 32                    # search view (NCHW, 1 channel)
    N_POINTS, NUM_CLASSES = 8, 2       # DZSpecimenClfToy(N=8, num_classes=2)
    # (patch_size=224 in the original module only affects crop size; irrelevant
    #  at toy scale since the toy samples single search-view values per point.)

    topview = jax.random.uniform(k_top, (B, Cin, H, W), jnp.float32)
    search_view = jax.random.uniform(k_sv, (B, 1, Hs, Ws), jnp.float32)
    params = init_params(k_par, cin=Cin, conv_ch=8,
                         n_points=N_POINTS, num_classes=NUM_CLASSES)

    logits = specimen_classifier_forward(topview, search_view, params,
                                         n_points=N_POINTS)
    logits = jax.block_until_ready(logits)

    ref = jax.block_until_ready(
        reference_forward(topview, search_view, params, n_points=N_POINTS))

    assert logits.shape == (B, NUM_CLASSES)
    assert bool(jnp.all(jnp.isfinite(logits)))
    assert bool(jnp.allclose(logits, ref, rtol=2e-3, atol=1e-3)), (logits, ref)
    print("KERNEL_OK")
</pallas_src>

<mosaic_0001>
module attributes {stable_mosaic.version = 11 : i64} {
  func.func @specimen_kernel(%arg0: i32, %arg1: memref<2x256x27xf32, #tpu.memory_space<vmem>>, %arg2: memref<2x512xf32, #tpu.memory_space<vmem>>, %arg3: memref<27x128xf32, #tpu.memory_space<vmem>>, %arg4: memref<1x128xf32, #tpu.memory_space<vmem>>, %arg5: memref<128x16xf32, #tpu.memory_space<vmem>>, %arg6: memref<1x16xf32, #tpu.memory_space<vmem>>, %arg7: memref<2x32x32xf32, #tpu.memory_space<vmem>>, %arg8: memref<8x128xf32, #tpu.memory_space<vmem>>, %arg9: memref<1x128xf32, #tpu.memory_space<vmem>>, %arg10: memref<1x2x128xf32, #tpu.memory_space<vmem>>) attributes {dimension_semantics = [#tpu.dimension_semantics<parallel>], iteration_bounds = array<i64: 1>, scalar_prefetch = 0 : i64, scratch_operands = 0 : i64, tpu.core_type = #tpu.core_type<tc>, window_params = [{transform_indices = @transform_0, window_bounds = array<i64: 2, 256, 27>}, {pipeline_mode = #tpu.pipeline_mode<synchronous>, transform_indices = @transform_1, window_bounds = array<i64: 2, 512>}, {pipeline_mode = #tpu.pipeline_mode<synchronous>, transform_indices = @transform_2, window_bounds = array<i64: 27, 128>}, {pipeline_mode = #tpu.pipeline_mode<synchronous>, transform_indices = @transform_3, window_bounds = array<i64: 1, 128>}, {pipeline_mode = #tpu.pipeline_mode<synchronous>, transform_indices = @transform_4, window_bounds = array<i64: 128, 16>}, {pipeline_mode = #tpu.pipeline_mode<synchronous>, transform_indices = @transform_5, window_bounds = array<i64: 1, 16>}, {transform_indices = @transform_6, window_bounds = array<i64: 2, 32, 32>}, {pipeline_mode = #tpu.pipeline_mode<synchronous>, transform_indices = @transform_7, window_bounds = array<i64: 8, 128>}, {pipeline_mode = #tpu.pipeline_mode<synchronous>, transform_indices = @transform_8, window_bounds = array<i64: 1, 128>}, {transform_indices = @transform_9, window_bounds = array<i64: 1, 2, 128>}]} {
    %c0 = arith.constant 0 : index
    %c0_0 = arith.constant 0 : index
    %c0_1 = arith.constant 0 : index
    %0 = vector.load %arg1[%c0, %c0_0, %c0_1] : memref<2x256x27xf32, #tpu.memory_space<vmem>>, vector<2x256x27xf32>
    %1 = vector.shape_cast %0 : vector<2x256x27xf32> to vector<512x27xf32>
    %c0_2 = arith.constant 0 : index
    %c0_3 = arith.constant 0 : index
    %2 = vector.load %arg3[%c0_2, %c0_3] : memref<27x128xf32, #tpu.memory_space<vmem>>, vector<27x128xf32>
    %cst = arith.constant dense<0.000000e+00> : vector<512x128xf32>
    %3 = tpu.matmul %1, %2, %cst {dimension_numbers = #tpu.dot_dimension_numbers<[1], [0], [0], [1], [0, 0, 1, 1], [], []>} : vector<512x27xf32>, vector<27x128xf32>, vector<512x128xf32> -> vector<512x128xf32>
    %c0_4 = arith.constant 0 : index
    %c0_5 = arith.constant 0 : index
    %4 = vector.load %arg4[%c0_4, %c0_5] : memref<1x128xf32, #tpu.memory_space<vmem>>, vector<1x128xf32>
    %5 = vector.broadcast %4 : vector<1x128xf32> to vector<512x128xf32>
    %6 = arith.addf %3, %5 : vector<512x128xf32>
    %cst_6 = arith.constant 0.000000e+00 : f32
    %7 = vector.broadcast %cst_6 : f32 to vector<512x128xf32>
    %8 = arith.maximumf %6, %7 : vector<512x128xf32>
    %c0_7 = arith.constant 0 : index
    %c0_8 = arith.constant 0 : index
    %9 = vector.load %arg2[%c0_7, %c0_8] : memref<2x512xf32, #tpu.memory_space<vmem>>, vector<2x512xf32>
    %cst_9 = arith.constant dense<0.000000e+00> : vector<2x128xf32>
    %10 = tpu.matmul %9, %8, %cst_9 {dimension_numbers = #tpu.dot_dimension_numbers<[1], [0], [0], [1], [0, 0, 1, 1], [], []>} : vector<2x512xf32>, vector<512x128xf32>, vector<2x128xf32> -> vector<2x128xf32>
    %c0_10 = arith.constant 0 : index
    %c0_11 = arith.constant 0 : index
    %11 = vector.load %arg5[%c0_10, %c0_11] : memref<128x16xf32, #tpu.memory_space<vmem>>, vector<128x16xf32>
    %cst_12 = arith.constant dense<0.000000e+00> : vector<2x16xf32>
    %12 = tpu.matmul %10, %11, %cst_12 {dimension_numbers = #tpu.dot_dimension_numbers<[1], [0], [0], [1], [0, 0, 1, 1], [], []>} : vector<2x128xf32>, vector<128x16xf32>, vector<2x16xf32> -> vector<2x16xf32>
    %c0_13 = arith.constant 0 : index
    %c0_14 = arith.constant 0 : index
    %13 = vector.load %arg6[%c0_13, %c0_14] : memref<1x16xf32, #tpu.memory_space<vmem>>, vector<1x16xf32>
    %14 = vector.broadcast %13 : vector<1x16xf32> to vector<2x16xf32>
    %15 = arith.addf %12, %14 : vector<2x16xf32>
    %16 = arith.negf %15 : vector<2x16xf32>
    %17 = math.exp %16 : vector<2x16xf32>
    %cst_15 = arith.constant 1.000000e+00 : f32
    %18 = vector.broadcast %cst_15 : f32 to vector<2x16xf32>
    %19 = arith.addf %18, %17 : vector<2x16xf32>
    %20 = arith.divf %18, %19 : vector<2x16xf32>
    %21 = vector.extract_strided_slice %20 {offsets = [0, 0], sizes = [2, 8], strides = [1, 1]} : vector<2x16xf32> to vector<2x8xf32>
    %cst_16 = arith.constant 3.100000e+01 : f32
    %22 = vector.broadcast %cst_16 : f32 to vector<2x8xf32>
    %23 = arith.mulf %21, %22 : vector<2x8xf32>
    %24 = vector.extract_strided_slice %20 {offsets = [0, 8], sizes = [2, 8], strides = [1, 1]} : vector<2x16xf32> to vector<2x8xf32>
    %cst_17 = arith.constant 3.100000e+01 : f32
    %25 = vector.broadcast %cst_17 : f32 to vector<2x8xf32>
    %26 = arith.mulf %24, %25 : vector<2x8xf32>
    %27 = tpu.iota {dimensions = array<i32: 2>} : vector<2x8x32xi32>
    %28 = arith.sitofp %27 : vector<2x8x32xi32> to vector<2x8x32xf32>
    %29 = tpu.iota {dimensions = array<i32: 2>} : vector<2x8x32xi32>
    %30 = arith.sitofp %29 : vector<2x8x32xi32> to vector<2x8x32xf32>
    %31 = vector.shape_cast %26 : vector<2x8xf32> to vector<2x8x1xf32>
    %32 = vector.broadcast %31 : vector<2x8x1xf32> to vector<2x8x32xf32>
    %33 = arith.subf %32, %28 : vector<2x8x32xf32>
    %34 = math.absf %33 : vector<2x8x32xf32>
    %cst_18 = arith.constant 1.000000e+00 : f32
    %35 = vector.broadcast %cst_18 : f32 to vector<2x8x32xf32>
    %36 = arith.subf %35, %34 : vector<2x8x32xf32>
    %cst_19 = arith.constant 0.000000e+00 : f32
    %37 = vector.broadcast %cst_19 : f32 to vector<2x8x32xf32>
    %38 = arith.maximumf %37, %36 : vector<2x8x32xf32>
    %39 = vector.shape_cast %23 : vector<2x8xf32> to vector<2x8x1xf32>
    %40 = vector.broadcast %39 : vector<2x8x1xf32> to vector<2x8x32xf32>
    %41 = arith.subf %40, %30 : vector<2x8x32xf32>
    %42 = math.absf %41 : vector<2x8x32xf32>
    %cst_20 = arith.constant 1.000000e+00 : f32
    %43 = vector.broadcast %cst_20 : f32 to vector<2x8x32xf32>
    %44 = arith.subf %43, %42 : vector<2x8x32xf32>
    %cst_21 = arith.constant 0.000000e+00 : f32
    %45 = vector.broadcast %cst_21 : f32 to vector<2x8x32xf32>
    %46 = arith.maximumf %45, %44 : vector<2x8x32xf32>
    %c0_22 = arith.constant 0 : index
    %c0_23 = arith.constant 0 : index
    %c0_24 = arith.constant 0 : index
    %47 = vector.load %arg7[%c0_22, %c0_23, %c0_24] : memref<2x32x32xf32, #tpu.memory_space<vmem>>, vector<2x32x32xf32>
    "tpu.trace_start"() <{level = 10 : i32, message = "bnh,bhw->bnw"}> : () -> ()
    %cst_25 = arith.constant dense<0.000000e+00> : vector<2x8x32xf32>
    %48 = tpu.matmul %38, %47, %cst_25 {dimension_numbers = #tpu.dot_dimension_numbers<[2], [1], [1], [2], [0, 0, 0, 1, 1, 2], [0], [0]>} : vector<2x8x32xf32>, vector<2x32x32xf32>, vector<2x8x32xf32> -> vector<2x8x32xf32>
    "tpu.trace_stop"() : () -> ()
    %49 = arith.mulf %48, %46 : vector<2x8x32xf32>
    %cst_26 = arith.constant dense<0.000000e+00> : vector<2x8xf32>
    %50 = vector.multi_reduction <add>, %49, %cst_26 [2] : vector<2x8x32xf32> to vector<2x8xf32>
    %c0_27 = arith.constant 0 : index
    %c0_28 = arith.constant 0 : index
    %51 = vector.load %arg8[%c0_27, %c0_28] : memref<8x128xf32, #tpu.memory_space<vmem>>, vector<8x128xf32>
    %cst_29 = arith.constant dense<0.000000e+00> : vector<2x128xf32>
    %52 = tpu.matmul %50, %51, %cst_29 {dimension_numbers = #tpu.dot_dimension_numbers<[1], [0], [0], [1], [0, 0, 1, 1], [], []>} : vector<2x8xf32>, vector<8x128xf32>, vector<2x128xf32> -> vector<2x128xf32>
    %c0_30 = arith.constant 0 : index
    %c0_31 = arith.constant 0 : index
    %53 = vector.load %arg9[%c0_30, %c0_31] : memref<1x128xf32, #tpu.memory_space<vmem>>, vector<1x128xf32>
    %54 = vector.broadcast %53 : vector<1x128xf32> to vector<2x128xf32>
    %55 = arith.addf %52, %54 : vector<2x128xf32>
    %c0_32 = arith.constant 0 : index
    %c0_33 = arith.constant 0 : index
    %c0_34 = arith.constant 0 : index
    %56 = vector.load %arg10[%c0_32, %c0_33, %c0_34] : memref<1x2x128xf32, #tpu.memory_space<vmem>>, vector<1x2x128xf32>
    %57 = vector.shape_cast %56 : vector<1x2x128xf32> to vector<2x128xf32>
    %58 = vector.shape_cast %55 : vector<2x128xf32> to vector<1x2x128xf32>
    tpu.vector_store %arg10[%c0_32, %c0_33, %c0_34], %58 {strides = array<i32>} : memref<1x2x128xf32, #tpu.memory_space<vmem>>, vector<1x2x128xf32>,
    return
  }
  func.func @transform_0(%arg0: i32) -> (i32, i32, i32) {
    %c0_i32 = arith.constant 0 : i32
    %c0_i32_0 = arith.constant 0 : i32
    %c0_i32_1 = arith.constant 0 : i32
    return %arg0, %c0_i32, %c0_i32_0 : i32, i32, i32
  }
  func.func @transform_1(%arg0: i32) -> (i32, i32) {
    %c0_i32 = arith.constant 0 : i32
    %c0_i32_0 = arith.constant 0 : i32
    %c0_i32_1 = arith.constant 0 : i32
    return %c0_i32, %c0_i32_0 : i32, i32
  }
  func.func @transform_2(%arg0: i32) -> (i32, i32) {
    %c0_i32 = arith.constant 0 : i32
    %c0_i32_0 = arith.constant 0 : i32
    %c0_i32_1 = arith.constant 0 : i32
    return %c0_i32, %c0_i32_0 : i32, i32
  }
  func.func @transform_3(%arg0: i32) -> (i32, i32) {
    %c0_i32 = arith.constant 0 : i32
    %c0_i32_0 = arith.constant 0 : i32
    %c0_i32_1 = arith.constant 0 : i32
    return %c0_i32, %c0_i32_0 : i32, i32
  }
  func.func @transform_4(%arg0: i32) -> (i32, i32) {
    %c0_i32 = arith.constant 0 : i32
    %c0_i32_0 = arith.constant 0 : i32
    %c0_i32_1 = arith.constant 0 : i32
    return %c0_i32, %c0_i32_0 : i32, i32
  }
  func.func @transform_5(%arg0: i32) -> (i32, i32) {
    %c0_i32 = arith.constant 0 : i32
    %c0_i32_0 = arith.constant 0 : i32
    %c0_i32_1 = arith.constant 0 : i32
    return %c0_i32, %c0_i32_0 : i32, i32
  }
  func.func @transform_6(%arg0: i32) -> (i32, i32, i32) {
    %c0_i32 = arith.constant 0 : i32
    %c0_i32_0 = arith.constant 0 : i32
    %c0_i32_1 = arith.constant 0 : i32
    return %arg0, %c0_i32, %c0_i32_0 : i32, i32, i32
  }
  func.func @transform_7(%arg0: i32) -> (i32, i32) {
    %c0_i32 = arith.constant 0 : i32
    %c0_i32_0 = arith.constant 0 : i32
    %c0_i32_1 = arith.constant 0 : i32
    return %c0_i32, %c0_i32_0 : i32, i32
  }
  func.func @transform_8(%arg0: i32) -> (i32, i32) {
    %c0_i32 = arith.constant 0 : i32
    %c0_i32_0 = arith.constant 0 : i32
    %c0_i32_1 = arith.constant 0 : i32
    return %c0_i32, %c0_i32_0 : i32, i32
  }
  func.func @transform_9(%arg0: i32) -> (i32, i32, i32) {
    %c0_i32 = arith.constant 0 : i32
    %c0_i32_0 = arith.constant 0 : i32
    %c0_i32_1 = arith.constant 0 : i32
    return %arg0, %c0_i32, %c0_i32_0 : i32, i32, i32
  }
}

</mosaic_0001>

<llo_original>
// kernel: tpu_custom_call.1
$region0: #{tpu_custom_call.1}
  #allocation0 [shape = 'u32[]', space=smem, size = 0x4, offset = 0x4, fixed_abs, tag = 'smem constant byte address 0x4 - core index']
  #allocation1 [shape = 'u32[72,128]{1,0:T(1,128)}', space=vmem, size = 0x9000, scoped, tag = 'internal scratch']
  %s0 = inlined_call_operand.vmem [shape: f32[2,256,27], index: 0, kind: input, shape index: {}]
  %s1 = inlined_call_operand.vmem [shape: f32[2,512], index: 1, kind: input, shape index: {}]
  %s2 = inlined_call_operand.vmem [shape: f32[27,128], index: 2, kind: input, shape index: {}]
  %s3 = inlined_call_operand.vmem [shape: f32[1,128], index: 3, kind: input, shape index: {}]
  %s4 = inlined_call_operand.vmem [shape: f32[128,16], index: 4, kind: input, shape index: {}]
  %s5 = inlined_call_operand.vmem [shape: f32[1,16], index: 5, kind: input, shape index: {}]
  %s6 = inlined_call_operand.vmem [shape: f32[2,32,32], index: 6, kind: input, shape index: {}]
  %s7 = inlined_call_operand.vmem [shape: f32[8,128], index: 7, kind: input, shape index: {}]
  %s8 = inlined_call_operand.vmem [shape: f32[1,128], index: 8, kind: input, shape index: {}]
  %s9 = inlined_call_operand.hbm [shape: f32[1,2,128], index: 9, kind: output, shape index: {}]
  %s10 = sld [smem:[#allocation0]]
  $region46: #{tpu_custom_call.1} parent=0
    _
  %s12 = ssub.s32 1, %s10
  %s13 = scalar_select 0, %s12, %s10
  $region1: #{tpu_custom_call.1} parent=0
    #allocation2 [shape = 'u8[1024]{0}', space=vmem, size = 0x400, scoped, tag = 'output window, operand 0, single buffered']
    #allocation3 [shape = 's32[1]{0}', space=sflag, size = 0x4, scoped, tag = 'scoped memory for tpu_custom_call.1']
    %14 = vsyncpa [#allocation3], 0
    // Predicated region
    $region2: #{tpu_custom_call.1} parent=1 // pred_check
      _
    $region3: #{tpu_custom_call.1} parent=1 // pred_check_branch
      %16 = sbr.rel (0) target = $region5
    $region4: #{tpu_custom_call.1} parent=1 // pred_region
      _
    $region5: #{tpu_custom_call.1} parent=1 // pred_fallthru
      _
    // Predicated region
    $region6: #{tpu_custom_call.1} parent=1 // pred_check
      _
    $region7: #{tpu_custom_call.1} parent=1 // pred_check_branch
      %18 = sbr.rel (0) target = $region9
    $region8: #{tpu_custom_call.1} parent=1 // pred_region
      _
    $region9: #{tpu_custom_call.1} parent=1 // pred_fallthru
      _
    // Predicated region
    $region10: #{tpu_custom_call.1} parent=1 // pred_check
      _
    $region11: #{tpu_custom_call.1} parent=1 // pred_check_branch
      %20 = sbr.rel (0) target = $region13
    $region12: #{tpu_custom_call.1} parent=1 // pred_region
      _
    $region13: #{tpu_custom_call.1} parent=1 // pred_fallthru
      _
    // Predicated region
    $region14: #{tpu_custom_call.1} parent=1 // pred_check
      _
    $region15: #{tpu_custom_call.1} parent=1 // pred_check_branch
      %22 = sbr.rel (0) target = $region17
    $region16: #{tpu_custom_call.1} parent=1 // pred_region
      _
    $region17: #{tpu_custom_call.1} parent=1 // pred_fallthru
      _
    // Predicated region
    $region18: #{tpu_custom_call.1} parent=1 // pred_check
      _
    $region19: #{tpu_custom_call.1} parent=1 // pred_check_branch
      %24 = sbr.rel (0) target = $region21
    $region20: #{tpu_custom_call.1} parent=1 // pred_region
      _
    $region21: #{tpu_custom_call.1} parent=1 // pred_fallthru
      _
    // Predicated region
    $region22: #{tpu_custom_call.1} parent=1 // pred_check
      _
    $region23: #{tpu_custom_call.1} parent=1 // pred_check_branch
      %26 = sbr.rel (0) target = $region25
    $region24: #{tpu_custom_call.1} parent=1 // pred_region
      _
    $region25: #{tpu_custom_call.1} parent=1 // pred_fallthru
      _
    // Predicated region
    $region26: #{tpu_custom_call.1} parent=1 // pred_check
      _
    $region27: #{tpu_custom_call.1} parent=1 // pred_check_branch
      %28 = sbr.rel (0) target = $region29
    $region28: #{tpu_custom_call.1} parent=1 // pred_region
      _
    $region29: #{tpu_custom_call.1} parent=1 // pred_fallthru
      _
    // Predicated region
    $region30: #{tpu_custom_call.1} parent=1 // pred_check
      _
    $region31: #{tpu_custom_call.1} parent=1 // pred_check_branch
      %30 = sbr.rel (0) target = $region33
    $region32: #{tpu_custom_call.1} parent=1 // pred_region
      _
    $region33: #{tpu_custom_call.1} parent=1 // pred_fallthru
      _
    // Predicated region
    $region34: #{tpu_custom_call.1} parent=1 // pred_check
      _
    $region35: #{tpu_custom_call.1} parent=1 // pred_check_branch
      %32 = sbr.rel (0) target = $region37
    $region36: #{tpu_custom_call.1} parent=1 // pred_region
      _
    $region37: #{tpu_custom_call.1} parent=1 // pred_fallthru
      _
    %v33 = vld [vmem:[%s0] sm:$0xff]
    %v34 = vld [vmem:[%s0 + $0x8] sm:$0xff]
    %v35 = vld [vmem:[%s0 + $0x10] sm:$0xff]
    %v36 = vld [vmem:[%s0 + $0x18] sm:$0xff]
    %v37 = vld [vmem:[%s0 + $0x20] sm:$0xff]
    %v38 = vld [vmem:[%s0 + $0x28] sm:$0xff]
    %v39 = vld [vmem:[%s0 + $0x30] sm:$0xff]
    %v40 = vld [vmem:[%s0 + $0x38] sm:$0xff]
    %v41 = vld [vmem:[%s0 + $0x40] sm:$0xff]
    %v42 = vld [vmem:[%s0 + $0x48] sm:$0xff]
    %v43 = vld [vmem:[%s0 + $0x50] sm:$0xff]
    %v44 = vld [vmem:[%s0 + $0x58] sm:$0xff]
    %v45 = vld [vmem:[%s0 + $0x60] sm:$0xff]
    %v46 = vld [vmem:[%s0 + $0x68] sm:$0xff]
    %v47 = vld [vmem:[%s0 + $0x70] sm:$0xff]
    %v48 = vld [vmem:[%s0 + $0x78] sm:$0xff]
    %v49 = vld [vmem:[%s0 + $0x80] sm:$0xff]
    %v50 = vld [vmem:[%s0 + $0x88] sm:$0xff]
    %v51 = vld [vmem:[%s0 + $0x90] sm:$0xff]
    %v52 = vld [vmem:[%s0 + $0x98] sm:$0xff]
    %v53 = vld [vmem:[%s0 + $0xa0] sm:$0xff]
    %v54 = vld [vmem:[%s0 + $0xa8] sm:$0xff]
    %v55 = vld [vmem:[%s0 + $0xb0] sm:$0xff]
    %v56 = vld [vmem:[%s0 + $0xb8] sm:$0xff]
    %v57 = vld [vmem:[%s0 + $0xc0] sm:$0xff]
    %v58 = vld [vmem:[%s0 + $0xc8] sm:$0xff]
    %v59 = vld [vmem:[%s0 + $0xd0] sm:$0xff]
    %v60 = vld [vmem:[%s0 + $0xd8] sm:$0xff]
    %v61 = vld [vmem:[%s0 + $0xe0] sm:$0xff]
    %v62 = vld [vmem:[%s0 + $0xe8] sm:$0xff]
    %v63 = vld [vmem:[%s0 + $0xf0] sm:$0xff]
    %v64 = vld [vmem:[%s0 + $0xf8] sm:$0xff]
    %v65 = vld [vmem:[%s0 + $0x100] sm:$0xff]
    %v66 = vld [vmem:[%s0 + $0x108] sm:$0xff]
    %v67 = vld [vmem:[%s0 + $0x110] sm:$0xff]
    %v68 = vld [vmem:[%s0 + $0x118] sm:$0xff]
    %v69 = vld [vmem:[%s0 + $0x120] sm:$0xff]
    %v70 = vld [vmem:[%s0 + $0x128] sm:$0xff]
    %v71 = vld [vmem:[%s0 + $0x130] sm:$0xff]
    %v72 = vld [vmem:[%s0 + $0x138] sm:$0xff]
    %v73 = vld [vmem:[%s0 + $0x140] sm:$0xff]
    %v74 = vld [vmem:[%s0 + $0x148] sm:$0xff]
    %v75 = vld [vmem:[%s0 + $0x150] sm:$0xff]
    %v76 = vld [vmem:[%s0 + $0x158] sm:$0xff]
    %v77 = vld [vmem:[%s0 + $0x160] sm:$0xff]
    %v78 = vld [vmem:[%s0 + $0x168] sm:$0xff]
    %v79 = vld [vmem:[%s0 + $0x170] sm:$0xff]
    %v80 = vld [vmem:[%s0 + $0x178] sm:$0xff]
    %v81 = vld [vmem:[%s0 + $0x180] sm:$0xff]
    %v82 = vld [vmem:[%s0 + $0x188] sm:$0xff]
    %v83 = vld [vmem:[%s0 + $0x190] sm:$0xff]
    %v84 = vld [vmem:[%s0 + $0x198] sm:$0xff]
    %v85 = vld [vmem:[%s0 + $0x1a0] sm:$0xff]
    %v86 = vld [vmem:[%s0 + $0x1a8] sm:$0xff]
    %v87 = vld [vmem:[%s0 + $0x1b0] sm:$0xff]
    %v88 = vld [vmem:[%s0 + $0x1b8] sm:$0xff]
    %v89 = vld [vmem:[%s0 + $0x1c0] sm:$0xff]
    %v90 = vld [vmem:[%s0 + $0x1c8] sm:$0xff]
    %v91 = vld [vmem:[%s0 + $0x1d0] sm:$0xff]
    %v92 = vld [vmem:[%s0 + $0x1d8] sm:$0xff]
    %v93 = vld [vmem:[%s0 + $0x1e0] sm:$0xff]
    %v94 = vld [vmem:[%s0 + $0x1e8] sm:$0xff]
    %v95 = vld [vmem:[%s0 + $0x1f0] sm:$0xff]
    %v96 = vld [vmem:[%s0 + $0x1f8] sm:$0xff]
    %v97 = vld [vmem:[%s2] sm:$0xff]
    %v98 = vld [vmem:[%s2 + $0x8] sm:$0xff]
    %v99 = vld [vmem:[%s2 + $0x10] sm:$0xff]
    %v100 = vld [vmem:[%s2 + $0x18] sm:$0x7]
    %v101 = vld [vmem:[%s3] sm:$0x1]
    %v103 = vperm.slane %v101, 0
    %vm105 = vcmask 220160
    %v107 = vsel %vm105, %v33, 0
    %v110 = vsel %vm105, %v34, 0
    %v113 = vsel %vm105, %v35, 0
    %v116 = vsel %vm105, %v36, 0
    %v119 = vsel %vm105, %v37, 0
    %v122 = vsel %vm105, %v38, 0
    %v125 = vsel %vm105, %v39, 0
    %v128 = vsel %vm105, %v40, 0
    %v131 = vsel %vm105, %v41, 0
    %v134 = vsel %vm105, %v42, 0
    %v137 = vsel %vm105, %v43, 0
    %v140 = vsel %vm105, %v44, 0
    %v143 = vsel %vm105, %v45, 0
    %v146 = vsel %vm105, %v46, 0
    %v149 = vsel %vm105, %v47, 0
    %v152 = vsel %vm105, %v48, 0
    %v155 = vsel %vm105, %v49, 0
    %v158 = vsel %vm105, %v50, 0
    %v161 = vsel %vm105, %v51, 0
    %v164 = vsel %vm105, %v52, 0
    %v167 = vsel %vm105, %v53, 0
    %v170 = vsel %vm105, %v54, 0
    %v173 = vsel %vm105, %v55, 0
    %v176 = vsel %vm105, %v56, 0
    %v179 = vsel %vm105, %v57, 0
    %v182 = vsel %vm105, %v58, 0
    %v185 = vsel %vm105, %v59, 0
    %v188 = vsel %vm105, %v60, 0
    %v191 = vsel %vm105, %v61, 0
    %v194 = vsel %vm105, %v62, 0
    %v197 = vsel %vm105, %v63, 0
    %v200 = vsel %vm105, %v64, 0
    %v203 = vsel %vm105, %v65, 0
    %v206 = vsel %vm105, %v66, 0
    %v209 = vsel %vm105, %v67, 0
    %v212 = vsel %vm105, %v68, 0
    %v215 = vsel %vm105, %v69, 0
    %v218 = vsel %vm105, %v70, 0
    %v221 = vsel %vm105, %v71, 0
    %v224 = vsel %vm105, %v72, 0
    %v227 = vsel %vm105, %v73, 0
    %v230 = vsel %vm105, %v74, 0
    %v233 = vsel %vm105, %v75, 0
    %v236 = vsel %vm105, %v76, 0
    %v239 = vsel %vm105, %v77, 0
    %v242 = vsel %vm105, %v78, 0
    %v245 = vsel %vm105, %v79, 0
    %v248 = vsel %vm105, %v80, 0
    %v251 = vsel %vm105, %v81, 0
    %v254 = vsel %vm105, %v82, 0
    %v257 = vsel %vm105, %v83, 0
    %v260 = vsel %vm105, %v84, 0
    %v263 = vsel %vm105, %v85, 0
    %v266 = vsel %vm105, %v86, 0
    %v269 = vsel %vm105, %v87, 0
    %v272 = vsel %vm105, %v88, 0
    %v275 = vsel %vm105, %v89, 0
    %v278 = vsel %vm105, %v90, 0
    %v281 = vsel %vm105, %v91, 0
    %v284 = vsel %vm105, %v92, 0
    %v287 = vsel %vm105, %v93, 0
    %v290 = vsel %vm105, %v94, 0
    %v293 = vsel %vm105, %v95, 0
    %v296 = vsel %vm105, %v96, 0
    %vm298 = vcmask 1042432
    %v300 = vsel %vm298, %v100, 0
    %302 = vmatpush.msra.mxu0 0.0
    %303 = vmatpush.msra.mxu0 0.0
    %304 = vmatpush.msra.mxu0 0.0
    %305 = vmatpush.msra.mxu0 0.0
    %306 = vmatpush.msra.mxu0 0.0
    %307 = vmatpush.msra.mxu0 0.0
    %308 = vmatpush.msra.mxu0 0.0
    %309 = vmatpush.msra.mxu0 0.0
    %310 = vmatpush.msra.mxu0 0.0
    %311 = vmatpush.msra.mxu0 0.0
    %312 = vmatpush.msra.mxu0 0.0
    %313 = vmatpush.msra.mxu0 0.0
    %314 = vmatpush.msra.mxu0 %v300
    %315 = vmatpush.msra.mxu0 %v99
    %316 = vmatpush.msra.mxu0 %v98
    %317 = vmatpush.msra.mxu0 %v97
    %318 = vmatmul.f32.gmra.mxu0 %v107
    %v319 = vpop.f32.mrf.mxu0
    %v320 = vadd.f32 %v103, %v319
    %321 = vmatmul.f32.gmra.mxu0 %v110
    %v322 = vpop.f32.mrf.mxu0
    %v323 = vadd.f32 %v103, %v322
    %324 = vmatmul.f32.gmra.mxu0 %v113
    %v325 = vpop.f32.mrf.mxu0
    %v326 = vadd.f32 %v103, %v325
    %327 = vmatmul.f32.gmra.mxu0 %v116
    %v328 = vpop.f32.mrf.mxu0
    %v329 = vadd.f32 %v103, %v328
    %330 = vmatmul.f32.gmra.mxu0 %v119
    %v331 = vpop.f32.mrf.mxu0
    %v332 = vadd.f32 %v103, %v331
    %333 = vmatmul.f32.gmra.mxu0 %v122
    %v334 = vpop.f32.mrf.mxu0
    %v335 = vadd.f32 %v103, %v334
    %336 = vmatmul.f32.gmra.mxu0 %v125
    %v337 = vpop.f32.mrf.mxu0
    %v338 = vadd.f32 %v103, %v337
    %339 = vmatmul.f32.gmra.mxu0 %v128
    %v340 = vpop.f32.mrf.mxu0
    %v341 = vadd.f32 %v103, %v340
    %342 = vmatmul.f32.gmra.mxu0 %v131
    %v343 = vpop.f32.mrf.mxu0
    %v344 = vadd.f32 %v103, %v343
    %345 = vmatmul.f32.gmra.mxu0 %v134
    %v346 = vpop.f32.mrf.mxu0
    %v347 = vadd.f32 %v103, %v346
    %348 = vmatmul.f32.gmra.mxu0 %v137
    %v349 = vpop.f32.mrf.mxu0
    %v350 = vadd.f32 %v103, %v349
    %351 = vmatmul.f32.gmra.mxu0 %v140
    %v352 = vpop.f32.mrf.mxu0
    %v353 = vadd.f32 %v103, %v352
    %354 = vmatmul.f32.gmra.mxu0 %v143
    %v355 = vpop.f32.mrf.mxu0
    %v356 = vadd.f32 %v103, %v355
    %357 = vmatmul.f32.gmra.mxu0 %v146
    %v358 = vpop.f32.mrf.mxu0
    %v359 = vadd.f32 %v103, %v358
    %360 = vmatmul.f32.gmra.mxu0 %v149
    %v361 = vpop.f32.mrf.mxu0
    %v362 = vadd.f32 %v103, %v361
    %363 = vmatmul.f32.gmra.mxu0 %v152
    %v364 = vpop.f32.mrf.mxu0
    %v365 = vadd.f32 %v103, %v364
    %366 = vmatmul.f32.gmra.mxu0 %v155
    %v367 = vpop.f32.mrf.mxu0
    %v368 = vadd.f32 %v103, %v367
    %369 = vmatmul.f32.gmra.mxu0 %v158
    %v370 = vpop.f32.mrf.mxu0
    %v371 = vadd.f32 %v103, %v370
    %372 = vmatmul.f32.gmra.mxu0 %v161
    %v373 = vpop.f32.mrf.mxu0
    %v374 = vadd.f32 %v103, %v373
    %375 = vmatmul.f32.gmra.mxu0 %v164
    %v376 = vpop.f32.mrf.mxu0
    %v377 = vadd.f32 %v103, %v376
    %378 = vmatmul.f32.gmra.mxu0 %v167
    %v379 = vpop.f32.mrf.mxu0
    %v380 = vadd.f32 %v103, %v379
    %381 = vmatmul.f32.gmra.mxu0 %v170
    %v382 = vpop.f32.mrf.mxu0
    %v383 = vadd.f32 %v103, %v382
    %384 = vmatmul.f32.gmra.mxu0 %v173
    %v385 = vpop.f32.mrf.mxu0
    %v386 = vadd.f32 %v103, %v385
    %387 = vmatmul.f32.gmra.mxu0 %v176
    %v388 = vpop.f32.mrf.mxu0
    %v389 = vadd.f32 %v103, %v388
    %390 = vmatmul.f32.gmra.mxu0 %v179
    %v391 = vpop.f32.mrf.mxu0
    %v392 = vadd.f32 %v103, %v391
    %393 = vmatmul.f32.gmra.mxu0 %v182
    %v394 = vpop.f32.mrf.mxu0
    %v395 = vadd.f32 %v103, %v394
    %396 = vmatmul.f32.gmra.mxu0 %v185
    %v397 = vpop.f32.mrf.mxu0
    %v398 = vadd.f32 %v103, %v397
    %399 = vmatmul.f32.gmra.mxu0 %v188
    %v400 = vpop.f32.mrf.mxu0
    %v401 = vadd.f32 %v103, %v400
    %402 = vmatmul.f32.gmra.mxu0 %v191
    %v403 = vpop.f32.mrf.mxu0
    %v404 = vadd.f32 %v103, %v403
    %405 = vmatmul.f32.gmra.mxu0 %v194
    %v406 = vpop.f32.mrf.mxu0
    %v407 = vadd.f32 %v103, %v406
    %408 = vmatmul.f32.gmra.mxu0 %v197
    %v409 = vpop.f32.mrf.mxu0
    %v410 = vadd.f32 %v103, %v409
    %411 = vmatmul.f32.gmra.mxu0 %v200
    %v412 = vpop.f32.mrf.mxu0
    %v413 = vadd.f32 %v103, %v412
    %414 = vmatmul.f32.gmra.mxu0 %v203
    %v415 = vpop.f32.mrf.mxu0
    %v416 = vadd.f32 %v103, %v415
    %417 = vmatmul.f32.gmra.mxu0 %v206
    %v418 = vpop.f32.mrf.mxu0
    %v419 = vadd.f32 %v103, %v418
    %420 = vmatmul.f32.gmra.mxu0 %v209
    %v421 = vpop.f32.mrf.mxu0
    %v422 = vadd.f32 %v103, %v421
    %423 = vmatmul.f32.gmra.mxu0 %v212
    %v424 = vpop.f32.mrf.mxu0
    %v425 = vadd.f32 %v103, %v424
    %426 = vmatmul.f32.gmra.mxu0 %v215
    %v427 = vpop.f32.mrf.mxu0
    %v428 = vadd.f32 %v103, %v427
    %429 = vmatmul.f32.gmra.mxu0 %v218
    %v430 = vpop.f32.mrf.mxu0
    %v431 = vadd.f32 %v103, %v430
    %432 = vmatmul.f32.gmra.mxu0 %v221
    %v433 = vpop.f32.mrf.mxu0
    %v434 = vadd.f32 %v103, %v433
    %435 = vmatmul.f32.gmra.mxu0 %v224
    %v436 = vpop.f32.mrf.mxu0
    %v437 = vadd.f32 %v103, %v436
    %438 = vmatmul.f32.gmra.mxu0 %v227
    %v439 = vpop.f32.mrf.mxu0
    %v440 = vadd.f32 %v103, %v439
    %441 = vmatmul.f32.gmra.mxu0 %v230
    %v442 = vpop.f32.mrf.mxu0
    %v443 = vadd.f32 %v103, %v442
    %444 = vmatmul.f32.gmra.mxu0 %v233
    %v445 = vpop.f32.mrf.mxu0
    %v446 = vadd.f32 %v103, %v445
    %447 = vmatmul.f32.gmra.mxu0 %v236
    %v448 = vpop.f32.mrf.mxu0
    %v449 = vadd.f32 %v103, %v448
    %450 = vmatmul.f32.gmra.mxu0 %v239
    %v451 = vpop.f32.mrf.mxu0
    %v452 = vadd.f32 %v103, %v451
    %453 = vmatmul.f32.gmra.mxu0 %v242
    %v454 = vpop.f32.mrf.mxu0
    %v455 = vadd.f32 %v103, %v454
    %456 = vmatmul.f32.gmra.mxu0 %v245
    %v457 = vpop.f32.mrf.mxu0
    %v458 = vadd.f32 %v103, %v457
    %459 = vmatmul.f32.gmra.mxu0 %v248
    %v460 = vpop.f32.mrf.mxu0
    %v461 = vadd.f32 %v103, %v460
    %462 = vmatmul.f32.gmra.mxu0 %v251
    %v463 = vpop.f32.mrf.mxu0
    %v464 = vadd.f32 %v103, %v463
    %465 = vmatmul.f32.gmra.mxu0 %v254
    %v466 = vpop.f32.mrf.mxu0
    %v467 = vadd.f32 %v103, %v466
    %468 = vmatmul.f32.gmra.mxu0 %v257
    %v469 = vpop.f32.mrf.mxu0
    %v470 = vadd.f32 %v103, %v469
    %471 = vmatmul.f32.gmra.mxu0 %v260
    %v472 = vpop.f32.mrf.mxu0
    %v473 = vadd.f32 %v103, %v472
    %474 = vmatmul.f32.gmra.mxu0 %v263
    %v475 = vpop.f32.mrf.mxu0
    %v476 = vadd.f32 %v103, %v475
    %477 = vmatmul.f32.gmra.mxu0 %v266
    %v478 = vpop.f32.mrf.mxu0
    %v479 = vadd.f32 %v103, %v478
    %480 = vmatmul.f32.gmra.mxu0 %v269
    %v481 = vpop.f32.mrf.mxu0
    %v482 = vadd.f32 %v103, %v481
    %483 = vmatmul.f32.gmra.mxu0 %v272
    %v484 = vpop.f32.mrf.mxu0
    %v485 = vadd.f32 %v103, %v484
    %486 = vmatmul.f32.gmra.mxu0 %v275
    %v487 = vpop.f32.mrf.mxu0
    %v488 = vadd.f32 %v103, %v487
    %489 = vmatmul.f32.gmra.mxu0 %v278
    %v490 = vpop.f32.mrf.mxu0
    %v491 = vadd.f32 %v103, %v490
    %492 = vmatmul.f32.gmra.mxu0 %v281
    %v493 = vpop.f32.mrf.mxu0
    %v494 = vadd.f32 %v103, %v493
    %495 = vmatmul.f32.gmra.mxu0 %v284
    %v496 = vpop.f32.mrf.mxu0
    %v497 = vadd.f32 %v103, %v496
    %498 = vmatmul.f32.gmra.mxu0 %v287
    %v499 = vpop.f32.mrf.mxu0
    %v500 = vadd.f32 %v103, %v499
    %501 = vmatmul.f32.gmra.mxu0 %v290
    %v502 = vpop.f32.mrf.mxu0
    %v503 = vadd.f32 %v103, %v502
    %504 = vmatmul.f32.gmra.mxu0 %v293
    %v505 = vpop.f32.mrf.mxu0
    %v506 = vadd.f32 %v103, %v505
    %507 = vmatmul.f32.gmra.mxu0 %v296
    %v508 = vpop.f32.mrf.mxu0
    %v509 = vadd.f32 %v103, %v508
    %510 = vdwg.mxu0
    %v511 = vmax.f32 %v320, 0.0
    %v512 = vmax.f32 %v323, 0.0
    %v513 = vmax.f32 %v326, 0.0
    %v514 = vmax.f32 %v329, 0.0
    %v515 = vmax.f32 %v332, 0.0
    %v516 = vmax.f32 %v335, 0.0
    %v517 = vmax.f32 %v338, 0.0
    %v518 = vmax.f32 %v341, 0.0
    %v519 = vmax.f32 %v344, 0.0
    %v520 = vmax.f32 %v347, 0.0
    %v521 = vmax.f32 %v350, 0.0
    %v522 = vmax.f32 %v353, 0.0
    %v523 = vmax.f32 %v356, 0.0
    %v524 = vmax.f32 %v359, 0.0
    %v525 = vmax.f32 %v362, 0.0
    %v526 = vmax.f32 %v365, 0.0
    %v527 = vmax.f32 %v368, 0.0
    %v528 = vmax.f32 %v371, 0.0
    %v529 = vmax.f32 %v374, 0.0
    %v530 = vmax.f32 %v377, 0.0
    %v531 = vmax.f32 %v380, 0.0
    %v532 = vmax.f32 %v383, 0.0
    %v533 = vmax.f32 %v386, 0.0
    %v534 = vmax.f32 %v389, 0.0
    %v535 = vmax.f32 %v392, 0.0
    %v536 = vmax.f32 %v395, 0.0
    %v537 = vmax.f32 %v398, 0.0
    %v538 = vmax.f32 %v401, 0.0
    %v539 = vmax.f32 %v404, 0.0
    %v540 = vmax.f32 %v407, 0.0
    %v541 = vmax.f32 %v410, 0.0
    %v542 = vmax.f32 %v413, 0.0
    %v543 = vmax.f32 %v416, 0.0
    %v544 = vmax.f32 %v419, 0.0
    %v545 = vmax.f32 %v422, 0.0
    %v546 = vmax.f32 %v425, 0.0
    %v547 = vmax.f32 %v428, 0.0
    %v548 = vmax.f32 %v431, 0.0
    %v549 = vmax.f32 %v434, 0.0
    %v550 = vmax.f32 %v437, 0.0
    %v551 = vmax.f32 %v440, 0.0
    %v552 = vmax.f32 %v443, 0.0
    %v553 = vmax.f32 %v446, 0.0
    %v554 = vmax.f32 %v449, 0.0
    %v555 = vmax.f32 %v452, 0.0
    %v556 = vmax.f32 %v455, 0.0
    %v557 = vmax.f32 %v458, 0.0
    %v558 = vmax.f32 %v461, 0.0
    %v559 = vmax.f32 %v464, 0.0
    %v560 = vmax.f32 %v467, 0.0
    %v561 = vmax.f32 %v470, 0.0
    %v562 = vmax.f32 %v473, 0.0
    %v563 = vmax.f32 %v476, 0.0
    %v564 = vmax.f32 %v479, 0.0
    %v565 = vmax.f32 %v482, 0.0
    %v566 = vmax.f32 %v485, 0.0
    %v567 = vmax.f32 %v488, 0.0
    %v568 = vmax.f32 %v491, 0.0
    %v569 = vmax.f32 %v494, 0.0
    %v570 = vmax.f32 %v497, 0.0
    %v571 = vmax.f32 %v500, 0.0
    %v572 = vmax.f32 %v503, 0.0
    %v573 = vmax.f32 %v506, 0.0
    %v574 = vmax.f32 %v509, 0.0
    %v575 = vld [vmem:[%s1] sm:$0xff]
    %577 = vst [vmem:[#allocation1] ss:$4 sm:$0xff] %v575
    %v578 = vld.sshfl [vmem:[#allocation1] sm:$0xff pattern:$0x73625140]
    %v579 = vld.sshfl [vmem:[#allocation1 + $0x8] sm:$0xff pattern:$0x73625140]
    %v580 = vld.sshfl [vmem:[#allocation1 + $0x10] sm:$0xff pattern:$0x73625140]
    %v581 = vld.sshfl [vmem:[#allocation1 + $0x18] sm:$0xff pattern:$0x73625140]
    %586 = vmatpush.msra.mxu0 %v526
    %587 = vmatpush.msra.mxu0 %v525
    %588 = vmatpush.msra.mxu0 %v524
    %589 = vmatpush.msra.mxu0 %v523
    %590 = vmatpush.msra.mxu0 %v522
    %591 = vmatpush.msra.mxu0 %v521
    %592 = vmatpush.msra.mxu0 %v520
    %593 = vmatpush.msra.mxu0 %v519
    %594 = vmatpush.msra.mxu0 %v518
    %595 = vmatpush.msra.mxu0 %v517
    %596 = vmatpush.msra.mxu0 %v516
    %597 = vmatpush.msra.mxu0 %v515
    %598 = vmatpush.msra.mxu0 %v514
    %599 = vmatpush.msra.mxu0 %v513
    %600 = vmatpush.msra.mxu0 %v512
    %601 = vmatpush.msra.mxu0 %v511
    %602 = vmatmul.f32.gmra.mxu0 %v578
    %v603 = vpop.f32.mrf.mxu0
    %v604 = vadd.f32 0.0, %v603
    %605 = vdwg.mxu0
    %606 = vmatpush.msra.mxu0 %v542
    %607 = vmatpush.msra.mxu0 %v541
    %608 = vmatpush.msra.mxu0 %v540
    %609 = vmatpush.msra.mxu0 %v539
    %610 = vmatpush.msra.mxu0 %v538
    %611 = vmatpush.msra.mxu0 %v537
    %612 = vmatpush.msra.mxu0 %v536
    %613 = vmatpush.msra.mxu0 %v535
    %614 = vmatpush.msra.mxu0 %v534
    %615 = vmatpush.msra.mxu0 %v533
    %616 = vmatpush.msra.mxu0 %v532
    %617 = vmatpush.msra.mxu0 %v531
    %618 = vmatpush.msra.mxu0 %v530
    %619 = vmatpush.msra.mxu0 %v529
    %620 = vmatpush.msra.mxu0 %v528
    %621 = vmatpush.msra.mxu0 %v527
    %622 = vmatmul.f32.gmra.mxu0 %v579
    %v623 = vpop.f32.mrf.mxu0
    %v624 = vadd.f32 %v604, %v623
    %625 = vdwg.mxu0
    %626 = vmatpush.msra.mxu0 %v558
    %627 = vmatpush.msra.mxu0 %v557
    %628 = vmatpush.msra.mxu0 %v556
    %629 = vmatpush.msra.mxu0 %v555
    %630 = vmatpush.msra.mxu0 %v554
    %631 = vmatpush.msra.mxu0 %v553
    %632 = vmatpush.msra.mxu0 %v552
    %633 = vmatpush.msra.mxu0 %v551
    %634 = vmatpush.msra.mxu0 %v550
    %635 = vmatpush.msra.mxu0 %v549
    %636 = vmatpush.msra.mxu0 %v548
    %637 = vmatpush.msra.mxu0 %v547
    %638 = vmatpush.msra.mxu0 %v546
    %639 = vmatpush.msra.mxu0 %v545
    %640 = vmatpush.msra.mxu0 %v544
    %641 = vmatpush.msra.mxu0 %v543
    %642 = vmatmul.f32.gmra.mxu0 %v580
    %v643 = vpop.f32.mrf.mxu0
    %v644 = vadd.f32 %v624, %v643
    %645 = vdwg.mxu0
    %646 = vmatpush.msra.mxu0 %v574
    %647 = vmatpush.msra.mxu0 %v573
    %648 = vmatpush.msra.mxu0 %v572
    %649 = vmatpush.msra.mxu0 %v571
    %650 = vmatpush.msra.mxu0 %v570
    %651 = vmatpush.msra.mxu0 %v569
    %652 = vmatpush.msra.mxu0 %v568
    %653 = vmatpush.msra.mxu0 %v567
    %654 = vmatpush.msra.mxu0 %v566
    %655 = vmatpush.msra.mxu0 %v565
    %656 = vmatpush.msra.mxu0 %v564
    %657 = vmatpush.msra.mxu0 %v563
    %658 = vmatpush.msra.mxu0 %v562
    %659 = vmatpush.msra.mxu0 %v561
    %660 = vmatpush.msra.mxu0 %v560
    %661 = vmatpush.msra.mxu0 %v559
    %662 = vmatmul.f32.gmra.mxu0 %v581
    %v663 = vpop.f32.mrf.mxu0
    %v664 = vadd.f32 %v644, %v663
    %665 = vdwg.mxu0
    %v666 = vld [vmem:[%s4] sm:$0xff]
    %v667 = vld [vmem:[%s4 + $0x8] sm:$0xff]
    %v668 = vld [vmem:[%s4 + $0x10] sm:$0xff]
    %v669 = vld [vmem:[%s4 + $0x18] sm:$0xff]
    %v670 = vld [vmem:[%s4 + $0x20] sm:$0xff]
    %v671 = vld [vmem:[%s4 + $0x28] sm:$0xff]
    %v672 = vld [vmem:[%s4 + $0x30] sm:$0xff]
    %v673 = vld [vmem:[%s4 + $0x38] sm:$0xff]
    %v674 = vld [vmem:[%s4 + $0x40] sm:$0xff]
    %v675 = vld [vmem:[%s4 + $0x48] sm:$0xff]
    %v676 = vld [vmem:[%s4 + $0x50] sm:$0xff]
    %v677 = vld [vmem:[%s4 + $0x58] sm:$0xff]
    %v678 = vld [vmem:[%s4 + $0x60] sm:$0xff]
    %v679 = vld [vmem:[%s4 + $0x68] sm:$0xff]
    %v680 = vld [vmem:[%s4 + $0x70] sm:$0xff]
    %v681 = vld [vmem:[%s4 + $0x78] sm:$0xff]
    %v682 = vld [vmem:[%s5] sm:$0x1]
    %v684 = vperm.slane %v682, 0
    %686 = vmatpush.msra.mxu0 %v681
    %687 = vmatpush.msra.mxu0 %v680
    %688 = vmatpush.msra.mxu0 %v679
    %689 = vmatpush.msra.mxu0 %v678
    %690 = vmatpush.msra.mxu0 %v677
    %691 = vmatpush.msra.mxu0 %v676
    %692 = vmatpush.msra.mxu0 %v675
    %693 = vmatpush.msra.mxu0 %v674
    %694 = vmatpush.msra.mxu0 %v673
    %695 = vmatpush.msra.mxu0 %v672
    %696 = vmatpush.msra.mxu0 %v671
    %697 = vmatpush.msra.mxu0 %v670
    %698 = vmatpush.msra.mxu0 %v669
    %699 = vmatpush.msra.mxu0 %v668
    %700 = vmatpush.msra.mxu0 %v667
    %701 = vmatpush.msra.mxu0 %v666
    %702 = vmatmul.f32.gmra.mxu0 %v664
    %v703 = vpop.f32.mrf.mxu0
    %v704 = vadd.f32 %v684, %v703
    %705 = vdwg.mxu0
    %v706 = vxor.u32 %v704, 2147483648
    %v707 = vmul.f32 %v706, 1.442695
    %v708 = vpow.pop %v707
    %v709 = vadd.f32 %v708, 1.0
    %v710 = vrcp.pop %v709
    %v711 = vmul.f32 %v709, %v710
    %v712 = vsub.f32 1.0, %v711
    %v713 = vmul.f32 %v710, %v712
    %v714 = vadd.f32 %v710, %v713
    %vm715 = vweird.f32 %v709
    %vm716 = vweird.f32 %v710
    %vm717 = vmor %vm715, %vm716
    %v718 = vsel %vm717, %v710, %v714
    %v719 = vand.u32 2147483647, %v709
    %vm720 = vcmp.eq.f32.partialorder %v719, 8.507059e+37
    %v721 = vand.u32 %v709, 2147483648
    %v722 = vor.u32 1.1754944e-38, %v721
    %v723 = vsel %vm720, %v722, %v718
    %v724 = vmul.f32 1.0, %v723
    %v725 = vmul.f32 %v724, 31.0
    %v726 = vlaneseq
    %v727 = vand.u32 %v726, 127
    %v728 = vcvt.s32.f32 %v727
    %v729 = vperm.slane %v725, 0
    %v730 = vlaneseq
    %v731 = vshrl.u32 %v730, 7
    %v732 = vadd.s32 %v731, 8
    %733 = vset.pattern.permute.xlu0 %v732
    %734 = vperm.xlu0 %733, %v729
    %v735 = vpop.permute.xlu0 %734
    %v736 = vperm.slane %v725, 1
    %v737 = vlaneseq
    %v738 = vshrl.u32 %v737, 7
    %v739 = vadd.s32 %v738, 8
    %740 = vset.pattern.permute.xlu0 %v739
    %741 = vperm.xlu0 %740, %v736
    %v742 = vpop.permute.xlu0 %741
    %v743 = vsub.f32 %v735, %v728
    %v744 = vsub.f32 %v742, %v728
    %v745 = vand.u32 2147483647, %v743
    %v746 = vand.u32 2147483647, %v744
    %v747 = vsub.f32 1.0, %v745
    %v748 = vsub.f32 1.0, %v746
    %v749 = vmax.f32 %v747, 0.0
    %v750 = vmax.f32 %v748, 0.0
    %v751 = vlaneseq
    %v752 = vshrl.u32 %v751, 7
    %754 = vset.pattern.permute.xlu0 %v752
    %755 = vperm.xlu0 %754, %v729
    %v756 = vpop.permute.xlu0 %755
    %v757 = vlaneseq
    %v758 = vshrl.u32 %v757, 7
    %760 = vset.pattern.permute.xlu0 %v758
    %761 = vperm.xlu0 %760, %v736
    %v762 = vpop.permute.xlu0 %761
    %v763 = vsub.f32 %v756, %v728
    %v764 = vsub.f32 %v762, %v728
    %v765 = vand.u32 2147483647, %v763
    %v766 = vand.u32 2147483647, %v764
    %v767 = vsub.f32 1.0, %v765
    %v768 = vsub.f32 1.0, %v766
    %v769 = vmax.f32 %v767, 0.0
    %v770 = vmax.f32 %v768, 0.0
    %v771 = vld [vmem:[%s6] sm:$0xff]
    %v772 = vld [vmem:[%s6 + $0x8] sm:$0xff]
    %v773 = vld [vmem:[%s6 + $0x10] sm:$0xff]
    %v774 = vld [vmem:[%s6 + $0x18] sm:$0xff]
    %v775 = vld [vmem:[%s6 + $0x20] sm:$0xff]
    %v776 = vld [vmem:[%s6 + $0x28] sm:$0xff]
    %v777 = vld [vmem:[%s6 + $0x30] sm:$0xff]
    %v778 = vld [vmem:[%s6 + $0x38] sm:$0xff]
    %vm779 = vcmask 261120
    %v781 = vsel %vm779, %v749, 0
    %783 = vmatpush.msra.mxu0 0.0
    %784 = vmatpush.msra.mxu0 0.0
    %785 = vmatpush.msra.mxu0 0.0
    %786 = vmatpush.msra.mxu0 0.0
    %787 = vmatpush.msra.mxu0 0.0
    %788 = vmatpush.msra.mxu0 0.0
    %789 = vmatpush.msra.mxu0 0.0
    %790 = vmatpush.msra.mxu0 0.0
    %791 = vmatpush.msra.mxu0 0.0
    %792 = vmatpush.msra.mxu0 0.0
    %793 = vmatpush.msra.mxu0 0.0
    %794 = vmatpush.msra.mxu0 0.0
    %795 = vmatpush.msra.mxu0 %v774
    %796 = vmatpush.msra.mxu0 %v773
    %797 = vmatpush.msra.mxu0 %v772
    %798 = vmatpush.msra.mxu0 %v771
    %799 = vmatmul.f32.gmra.mxu0 %v781
    %v800 = vpop.f32.mrf.mxu0
    %v801 = vadd.f32 0.0, %v800
    %802 = vdwg.mxu0
    %v804 = vsel %vm779, %v750, 0
    %806 = vmatpush.msra.mxu0 0.0
    %807 = vmatpush.msra.mxu0 0.0
    %808 = vmatpush.msra.mxu0 0.0
    %809 = vmatpush.msra.mxu0 0.0
    %810 = vmatpush.msra.mxu0 0.0
    %811 = vmatpush.msra.mxu0 0.0
    %812 = vmatpush.msra.mxu0 0.0
    %813 = vmatpush.msra.mxu0 0.0
    %814 = vmatpush.msra.mxu0 0.0
    %815 = vmatpush.msra.mxu0 0.0
    %816 = vmatpush.msra.mxu0 0.0
    %817 = vmatpush.msra.mxu0 0.0
    %818 = vmatpush.msra.mxu0 %v778
    %819 = vmatpush.msra.mxu0 %v777
    %820 = vmatpush.msra.mxu0 %v776
    %821 = vmatpush.msra.mxu0 %v775
    %822 = vmatmul.f32.gmra.mxu0 %v804
    %v823 = vpop.f32.mrf.mxu0
    %v824 = vadd.f32 0.0, %v823
    %825 = vdwg.mxu0
    %v826 = vmul.f32 %v801, %v769
    %v827 = vmul.f32 %v824, %v770
    %v828 = vsel %vm779, %v826, 0.0
    %829 = vadd.xlane.f32.xlu0 %v828
    %v830 = vpop.xlane.xlu0 %829
    %v831 = vsel %vm779, %v827, 0.0
    %832 = vadd.xlane.f32.xlu0 %v831
    %v833 = vpop.xlane.xlu0 %832
    %v834 = vld [vmem:[%s7] sm:$0xff]
    %v835 = vld [vmem:[%s8] sm:$0x1]
    %v837 = vperm.slane %v835, 0
    %v841 = vperm.slane %v830, %v727
    %v842 = vperm.slane %v833, %v727
    %vm843 = vcmask 1041409
    %v844 = vsel %vm843, %v842, %v841
    %vm845 = vcmask 64512
    %v846 = vsel %vm845, %v844, 0
    %848 = vmatpush.msra.mxu0 0.0
    %849 = vmatpush.msra.mxu0 0.0
    %850 = vmatpush.msra.mxu0 0.0
    %851 = vmatpush.msra.mxu0 0.0
    %852 = vmatpush.msra.mxu0 0.0
    %853 = vmatpush.msra.mxu0 0.0
    %854 = vmatpush.msra.mxu0 0.0
    %855 = vmatpush.msra.mxu0 0.0
    %856 = vmatpush.msra.mxu0 0.0
    %857 = vmatpush.msra.mxu0 0.0
    %858 = vmatpush.msra.mxu0 0.0
    %859 = vmatpush.msra.mxu0 0.0
    %860 = vmatpush.msra.mxu0 0.0
    %861 = vmatpush.msra.mxu0 0.0
    %862 = vmatpush.msra.mxu0 0.0
    %863 = vmatpush.msra.mxu0 %v834
    %864 = vmatmul.f32.gmra.mxu0 %v846
    %v865 = vpop.f32.mrf.mxu0
    %v866 = vadd.f32 %v837, %v865
    %867 = vdwg.mxu0
    %868 = vst [vmem:[#allocation2] sm:$0x3] %v866
    // Predicated region
    $region38: #{tpu_custom_call.1} parent=1 // pred_check
      _
    $region39: #{tpu_custom_call.1} parent=1 // pred_check_branch
      %870 = sbr.rel (0) target = $region41
    $region40: #{tpu_custom_call.1} parent=1 // pred_region
      %872 = vsyncadd [#allocation3], 0
      %s874 = sshll.u32 [#allocation2], 4
      %s875 = int_to_ptr.vmem [resolvable:$true] %s874
      %s876 = sshll.u32 %s9, 4
      %s877 = int_to_ptr.hbm [resolvable:$true] %s876
      %879 = dma.vmem_to_hbm [thread:$0]  %s875, 32, %s877, [#allocation3]
    $region41: #{tpu_custom_call.1} parent=1 // pred_fallthru
      _
    // Predicated region
    $region42: #{tpu_custom_call.1} parent=1 // pred_check
      _
    $region43: #{tpu_custom_call.1} parent=1 // pred_check_branch
      %881 = sbr.rel (0) target = $region45
    $region44: #{tpu_custom_call.1} parent=1 // pred_region
      %883 = dma.done [#allocation3], 32
    $region45: #{tpu_custom_call.1} parent=1 // pred_fallthru
      _
    %884 = vsyncpa [#allocation3], 1

</llo_original>
